<compile_context>
chip_gen: v5e
topology: v5e:2x2
jax: 0.10.0
libtpu: 0.0.40
codegen_flags: <defaults>
</compile_context>

<pallas_src>
import functools

import jax
import jax.numpy as jnp
from jax.experimental import pallas as pl
from jax.experimental.pallas import tpu as pltpu


MAX_TB = 512      # batch-tile cap for large batches (multiple of 16)
OUT_LANES = 128   # padded output lane width (lane-dense store)


def _round_up(x, m):
    return ((x + m - 1) // m) * m


def _auto_tb(batch, max_tb=MAX_TB):
    """Pick a batch tile: exact for small batches, 2 steps for mid batches
    (v7x megacore), capped at max_tb for large batches."""
    padded8 = _round_up(batch, 8)
    if padded8 > max_tb:
        return max_tb                     # big batch: >= 2 grid steps of 512 rows
    if padded8 >= 256 and padded8 % 32 == 0:
        return padded8 // 2               # mid batch: 2 steps -> both v7x TCs busy
    return padded8                        # small batch: single exact tile


def _use_bf16_tanh():
    """bf16 tanh halves EUP occupancy on v6e/v7x; v5e EUP has no bf16 path."""
    try:
        kind = jax.devices()[0].device_kind.lower()
    except Exception:
        return False
    return any(tag in kind for tag in ("v6", "v7", "7x"))


def _mlp_kernel(obs_ref, w1_ref, b1_ref, w2_ref, b2_ref, w3_ref, b3_ref,
                out_ref, *, bf16_tanh):
    # Three matmuls + tanh for one (tb, input_dim) obs tile.
    # MXU: bf16 inputs, f32 accumulation.  Bias add in f32 on the VPU.
    # tanh on the EUP: bf16 on v6e/v7x, f32 on v5e.
    x = obs_ref[...].astype(jnp.bfloat16)

    z1 = jnp.dot(x, w1_ref[...], preferred_element_type=jnp.float32) + b1_ref[...]
    if bf16_tanh:
        h1 = jnp.tanh(z1.astype(jnp.bfloat16))      # already bf16 for next matmul
    else:
        h1 = jnp.tanh(z1).astype(jnp.bfloat16)

    z2 = jnp.dot(h1, w2_ref[...], preferred_element_type=jnp.float32) + b2_ref[...]
    if bf16_tanh:
        h2 = jnp.tanh(z2.astype(jnp.bfloat16))
    else:
        h2 = jnp.tanh(z2).astype(jnp.bfloat16)

    z3 = jnp.dot(h2, w3_ref[...], preferred_element_type=jnp.float32) + b3_ref[...]
    if bf16_tanh:
        out_ref[...] = jnp.tanh(z3.astype(jnp.bfloat16))
    else:
        out_ref[...] = jnp.tanh(z3).astype(jnp.bfloat16)


def prepare_params(w1, b1, w2, b2, w3, b3, out_lanes=OUT_LANES):
    """One-time param prep: bf16 weight cast + lane-dense padding of the
    narrow output head (hoisted out of the per-call forward path)."""
    action_dim = w3.shape[1]
    out_w = max(out_lanes, _round_up(action_dim, 128))
    w3p = jnp.pad(w3, ((0, 0), (0, out_w - action_dim)))
    b3p = jnp.pad(b3, ((0, 0), (0, out_w - action_dim)))
    return (
        w1.astype(jnp.bfloat16), b1.astype(jnp.float32),
        w2.astype(jnp.bfloat16), b2.astype(jnp.float32),
        w3p.astype(jnp.bfloat16), b3p.astype(jnp.float32),
    )


@functools.partial(jax.jit, static_argnames=("action_dim", "tb", "bf16_tanh"))
def bipedal_walker_forward(obs, w1, b1, w2, b2, w3, b3, *, action_dim,
                           tb=None, bf16_tanh=False):
    batch, input_dim = obs.shape
    hidden = w1.shape[1]
    out_w = w3.shape[1]           # already 128-lane padded by prepare_params

    if tb is None:
        tb = _auto_tb(batch)

    # Pad batch to a multiple of the tile (garbage rows sliced off below).
    padded_b = _round_up(batch, tb)
    if padded_b != batch:
        obs = jnp.pad(obs, ((0, padded_b - batch), (0, 0)))

    grid = (padded_b // tb,)
    const = lambda i: (0, 0)      # weights/biases: same block every step -> resident

    flops = 2 * padded_b * (input_dim * hidden + hidden * hidden + hidden * out_w)
    transcendentals = padded_b * (2 * hidden + out_w)
    bytes_accessed = (
        padded_b * input_dim * 4                                        # obs (f32)
        + (input_dim * hidden + hidden * hidden + hidden * out_w) * 2   # weights (bf16)
        + (2 * hidden + out_w) * 4                                      # biases (f32)
        + padded_b * out_w * 2                                          # out (bf16)
    )

    out = pl.pallas_call(
        functools.partial(_mlp_kernel, bf16_tanh=bf16_tanh),
        out_shape=jax.ShapeDtypeStruct((padded_b, out_w), jnp.bfloat16),
        grid=grid,
        in_specs=[
            pl.BlockSpec((tb, input_dim), lambda i: (i, 0)),   # obs tile
            pl.BlockSpec((input_dim, hidden), const),          # w1 (bf16)
            pl.BlockSpec((1, hidden), const),                  # b1 (f32)
            pl.BlockSpec((hidden, hidden), const),             # w2 (bf16)
            pl.BlockSpec((1, hidden), const),                  # b2 (f32)
            pl.BlockSpec((hidden, out_w), const),              # w3 (bf16, padded)
            pl.BlockSpec((1, out_w), const),                   # b3 (f32, padded)
        ],
        out_specs=pl.BlockSpec((tb, out_w), lambda i: (i, 0)),
        compiler_params=pltpu.CompilerParams(
            dimension_semantics=("parallel",),
        ),
        cost_estimate=pl.CostEstimate(
            flops=flops,
            transcendentals=transcendentals,
            bytes_accessed=bytes_accessed,
        ),
    )(obs, w1, b1, w2, b2, w3, b3)

    # Drop padded rows/columns; return f32 to match the PyTorch module's dtype.
    return out[:batch, :action_dim].astype(jnp.float32)


def _xavier_uniform(key, fan_in, fan_out):
    # nn.init.xavier_uniform_: bound = sqrt(6 / (fan_in + fan_out)).
    # Weight returned in (in_features, out_features) layout (transposed vs PyTorch).
    bound = (6.0 / (fan_in + fan_out)) ** 0.5
    return jax.random.uniform(
        key, (fan_in, fan_out), minval=-bound, maxval=bound, dtype=jnp.float32
    )


def init_params(key, input_dim=24, hidden_size=256, action_dim=4):
    k1, k2, k3, k4, k5, k6 = jax.random.split(key, 6)

    # Biases: uniform(-1/sqrt(fan_in), 1/sqrt(fan_in)) like PyTorch's default
    # nn.Linear bias init.
    def bias(k, fan_in, fan_out):
        b = 1.0 / (fan_in ** 0.5)
        return jax.random.uniform(
            k, (1, fan_out), minval=-b, maxval=b, dtype=jnp.float32
        )

    w1 = _xavier_uniform(k1, input_dim, hidden_size)
    b1 = bias(k2, input_dim, hidden_size)
    w2 = _xavier_uniform(k3, hidden_size, hidden_size)
    b2 = bias(k4, hidden_size, hidden_size)
    w3 = _xavier_uniform(k5, hidden_size, action_dim)
    b3 = bias(k6, hidden_size, action_dim)
    return w1, b1, w2, b2, w3, b3


def _reference_forward(obs, w1, b1, w2, b2, w3, b3):
    h1 = jnp.tanh(obs @ w1 + b1)
    h2 = jnp.tanh(h1 @ w2 + b2)
    return jnp.tanh(h2 @ w3 + b3)


if __name__ == "__main__":
    key = jax.random.PRNGKey(0)
    k_obs, k_params = jax.random.split(key)

    batch = 8
    input_dim, hidden_size, action_dim = 24, 256, 4

    obs = jax.random.normal(k_obs, (batch, input_dim), dtype=jnp.float32)
    raw_params = init_params(k_params, input_dim, hidden_size, action_dim)

    # One-time parameter prep (bf16 cast + output-head padding), hoisted out
    # of the per-call forward.
    prepped = prepare_params(*raw_params)
    bf16_tanh = _use_bf16_tanh()

    out = bipedal_walker_forward(
        obs, *prepped, action_dim=action_dim, bf16_tanh=bf16_tanh
    )
    out = jax.block_until_ready(out)

    ref = _reference_forward(obs, *raw_params)   # f32 reference
    assert out.shape == (batch, action_dim)
    assert jnp.all(jnp.isfinite(out))
    # bf16 MXU inputs, bf16 tanh (v6e/v7x) and bf16 output store vs f32 ref.
    assert jnp.allclose(out, ref, atol=4e-2, rtol=0.0)

    print("KERNEL_OK")
</pallas_src>

<mosaic_0001>
module attributes {stable_mosaic.version = 11 : i64} {
  func.func @_mlp_kernel(%arg0: i32, %arg1: memref<8x24xf32, #tpu.memory_space<vmem>>, %arg2: memref<24x256xbf16, #tpu.memory_space<vmem>>, %arg3: memref<1x256xf32, #tpu.memory_space<vmem>>, %arg4: memref<256x256xbf16, #tpu.memory_space<vmem>>, %arg5: memref<1x256xf32, #tpu.memory_space<vmem>>, %arg6: memref<256x128xbf16, #tpu.memory_space<vmem>>, %arg7: memref<1x128xf32, #tpu.memory_space<vmem>>, %arg8: memref<8x128xbf16, #tpu.memory_space<vmem>>) attributes {dimension_semantics = [#tpu.dimension_semantics<parallel>], iteration_bounds = array<i64: 1>, scalar_prefetch = 0 : i64, scratch_operands = 0 : i64, tpu.core_type = #tpu.core_type<tc>, window_params = [{transform_indices = @transform_0, window_bounds = array<i64: 8, 24>}, {pipeline_mode = #tpu.pipeline_mode<synchronous>, transform_indices = @transform_1, window_bounds = array<i64: 24, 256>}, {pipeline_mode = #tpu.pipeline_mode<synchronous>, transform_indices = @transform_2, window_bounds = array<i64: 1, 256>}, {pipeline_mode = #tpu.pipeline_mode<synchronous>, transform_indices = @transform_3, window_bounds = array<i64: 256, 256>}, {pipeline_mode = #tpu.pipeline_mode<synchronous>, transform_indices = @transform_4, window_bounds = array<i64: 1, 256>}, {pipeline_mode = #tpu.pipeline_mode<synchronous>, transform_indices = @transform_5, window_bounds = array<i64: 256, 128>}, {pipeline_mode = #tpu.pipeline_mode<synchronous>, transform_indices = @transform_6, window_bounds = array<i64: 1, 128>}, {transform_indices = @transform_7, window_bounds = array<i64: 8, 128>}]} {
    %c0 = arith.constant 0 : index
    %c0_0 = arith.constant 0 : index
    %0 = vector.load %arg1[%c0, %c0_0] : memref<8x24xf32, #tpu.memory_space<vmem>>, vector<8x24xf32>
    %1 = arith.truncf %0 : vector<8x24xf32> to vector<8x24xbf16>
    %c0_1 = arith.constant 0 : index
    %c0_2 = arith.constant 0 : index
    %2 = vector.load %arg2[%c0_1, %c0_2] : memref<24x256xbf16, #tpu.memory_space<vmem>>, vector<24x256xbf16>
    %cst = arith.constant dense<0.000000e+00> : vector<8x256xf32>
    %3 = tpu.matmul %1, %2, %cst {dimension_numbers = #tpu.dot_dimension_numbers<[1], [0], [0], [1], [0, 0, 1, 1], [], []>} : vector<8x24xbf16>, vector<24x256xbf16>, vector<8x256xf32> -> vector<8x256xf32>
    %c0_3 = arith.constant 0 : index
    %c0_4 = arith.constant 0 : index
    %4 = vector.load %arg3[%c0_3, %c0_4] : memref<1x256xf32, #tpu.memory_space<vmem>>, vector<1x256xf32>
    %5 = vector.broadcast %4 : vector<1x256xf32> to vector<8x256xf32>
    %6 = arith.addf %3, %5 : vector<8x256xf32>
    %7 = math.tanh %6 : vector<8x256xf32>
    %8 = arith.truncf %7 : vector<8x256xf32> to vector<8x256xbf16>
    %c0_5 = arith.constant 0 : index
    %c0_6 = arith.constant 0 : index
    %9 = vector.load %arg4[%c0_5, %c0_6] : memref<256x256xbf16, #tpu.memory_space<vmem>>, vector<256x256xbf16>
    %cst_7 = arith.constant dense<0.000000e+00> : vector<8x256xf32>
    %10 = tpu.matmul %8, %9, %cst_7 {dimension_numbers = #tpu.dot_dimension_numbers<[1], [0], [0], [1], [0, 0, 1, 1], [], []>} : vector<8x256xbf16>, vector<256x256xbf16>, vector<8x256xf32> -> vector<8x256xf32>
    %c0_8 = arith.constant 0 : index
    %c0_9 = arith.constant 0 : index
    %11 = vector.load %arg5[%c0_8, %c0_9] : memref<1x256xf32, #tpu.memory_space<vmem>>, vector<1x256xf32>
    %12 = vector.broadcast %11 : vector<1x256xf32> to vector<8x256xf32>
    %13 = arith.addf %10, %12 : vector<8x256xf32>
    %14 = math.tanh %13 : vector<8x256xf32>
    %15 = arith.truncf %14 : vector<8x256xf32> to vector<8x256xbf16>
    %c0_10 = arith.constant 0 : index
    %c0_11 = arith.constant 0 : index
    %16 = vector.load %arg6[%c0_10, %c0_11] : memref<256x128xbf16, #tpu.memory_space<vmem>>, vector<256x128xbf16>
    %cst_12 = arith.constant dense<0.000000e+00> : vector<8x128xf32>
    %17 = tpu.matmul %15, %16, %cst_12 {dimension_numbers = #tpu.dot_dimension_numbers<[1], [0], [0], [1], [0, 0, 1, 1], [], []>} : vector<8x256xbf16>, vector<256x128xbf16>, vector<8x128xf32> -> vector<8x128xf32>
    %c0_13 = arith.constant 0 : index
    %c0_14 = arith.constant 0 : index
    %18 = vector.load %arg7[%c0_13, %c0_14] : memref<1x128xf32, #tpu.memory_space<vmem>>, vector<1x128xf32>
    %19 = vector.broadcast %18 : vector<1x128xf32> to vector<8x128xf32>
    %20 = arith.addf %17, %19 : vector<8x128xf32>
    %21 = math.tanh %20 : vector<8x128xf32>
    %22 = arith.truncf %21 : vector<8x128xf32> to vector<8x128xbf16>
    %c0_15 = arith.constant 0 : index
    %c0_16 = arith.constant 0 : index
    %23 = vector.load %arg8[%c0_15, %c0_16] : memref<8x128xbf16, #tpu.memory_space<vmem>>, vector<8x128xbf16>
    tpu.vector_store %arg8[%c0_15, %c0_16], %22 {strides = array<i32>} : memref<8x128xbf16, #tpu.memory_space<vmem>>, vector<8x128xbf16>,
    return
  }
  func.func @transform_0(%arg0: i32) -> (i32, i32) {
    %c0_i32 = arith.constant 0 : i32
    %c0_i32_0 = arith.constant 0 : i32
    return %arg0, %c0_i32 : i32, i32
  }
  func.func @transform_1(%arg0: i32) -> (i32, i32) {
    %c0_i32 = arith.constant 0 : i32
    %c0_i32_0 = arith.constant 0 : i32
    %c0_i32_1 = arith.constant 0 : i32
    return %c0_i32, %c0_i32_0 : i32, i32
  }
  func.func @transform_2(%arg0: i32) -> (i32, i32) {
    %c0_i32 = arith.constant 0 : i32
    %c0_i32_0 = arith.constant 0 : i32
    %c0_i32_1 = arith.constant 0 : i32
    return %c0_i32, %c0_i32_0 : i32, i32
  }
  func.func @transform_3(%arg0: i32) -> (i32, i32) {
    %c0_i32 = arith.constant 0 : i32
    %c0_i32_0 = arith.constant 0 : i32
    %c0_i32_1 = arith.constant 0 : i32
    return %c0_i32, %c0_i32_0 : i32, i32
  }
  func.func @transform_4(%arg0: i32) -> (i32, i32) {
    %c0_i32 = arith.constant 0 : i32
    %c0_i32_0 = arith.constant 0 : i32
    %c0_i32_1 = arith.constant 0 : i32
    return %c0_i32, %c0_i32_0 : i32, i32
  }
  func.func @transform_5(%arg0: i32) -> (i32, i32) {
    %c0_i32 = arith.constant 0 : i32
    %c0_i32_0 = arith.constant 0 : i32
    %c0_i32_1 = arith.constant 0 : i32
    return %c0_i32, %c0_i32_0 : i32, i32
  }
  func.func @transform_6(%arg0: i32) -> (i32, i32) {
    %c0_i32 = arith.constant 0 : i32
    %c0_i32_0 = arith.constant 0 : i32
    %c0_i32_1 = arith.constant 0 : i32
    return %c0_i32, %c0_i32_0 : i32, i32
  }
  func.func @transform_7(%arg0: i32) -> (i32, i32) {
    %c0_i32 = arith.constant 0 : i32
    %c0_i32_0 = arith.constant 0 : i32
    return %arg0, %c0_i32 : i32, i32
  }
}

</mosaic_0001>

<llo_original>
// kernel: bipedal_walker_forward.1
$region0: #{bipedal_walker_forward.1}
  #allocation0 [shape = 'u32[]', space=smem, size = 0x4, offset = 0x4, fixed_abs, tag = 'smem constant byte address 0x4 - core index']
  #allocation1 [shape = 'u32[72,128]{1,0:T(1,128)}', space=vmem, size = 0x9000, scoped, tag = 'internal scratch']
  %s0 = inlined_call_operand.hbm [shape: f32[8,24], index: 0, kind: input, shape index: {}]
  %s1 = inlined_call_operand.hbm [shape: bf16[24,256], index: 1, kind: input, shape index: {}]
  %s2 = inlined_call_operand.hbm [shape: f32[1,256], index: 2, kind: input, shape index: {}]
  %s3 = inlined_call_operand.hbm [shape: bf16[256,256], index: 3, kind: input, shape index: {}]
  %s4 = inlined_call_operand.vmem [shape: f32[1,256], index: 4, kind: input, shape index: {}]
  %s5 = inlined_call_operand.hbm [shape: bf16[256,128], index: 5, kind: input, shape index: {}]
  %s6 = inlined_call_operand.vmem [shape: f32[1,128], index: 6, kind: input, shape index: {}]
  %s7 = inlined_call_operand.vmem [shape: bf16[8,128], index: 7, kind: output, shape index: {}]
  %s8 = sld [smem:[#allocation0]]
  $region58: #{bipedal_walker_forward.1} parent=0
    _
  %s10 = ssub.s32 1, %s8
  %s11 = scalar_select 0, %s10, %s8
  $region1: #{bipedal_walker_forward.1} parent=0
    #allocation2 [shape = 'u8[4096]{0}', space=vmem, size = 0x1000, scoped, tag = 'input window, operand 0, single buffered']
    #allocation3 [shape = 's32[1]{0}', space=sflag, size = 0x4, scoped, tag = 'scoped memory for bipedal_walker_forward.1']
    #allocation4 [shape = 'u8[12288]{0}', space=vmem, size = 0x3000, scoped, tag = 'input window, operand 1, single buffered']
    #allocation5 [shape = 's32[1]{0}', space=sflag, size = 0x4, scoped, tag = 'scoped memory for bipedal_walker_forward.1']
    #allocation6 [shape = 'u8[1024]{0}', space=vmem, size = 0x400, scoped, tag = 'input window, operand 2, single buffered']
    #allocation7 [shape = 'u8[131072]{0}', space=vmem, size = 0x20000, scoped, tag = 'input window, operand 3, single buffered']
    #allocation8 [shape = 's32[1]{0}', space=sflag, size = 0x4, scoped, tag = 'scoped memory for bipedal_walker_forward.1']
    #allocation9 [shape = 'u8[65536]{0}', space=vmem, size = 0x10000, scoped, tag = 'input window, operand 5, single buffered']
    %12 = vsyncpa [#allocation3], 0
    %13 = vsyncpa [#allocation5], 0
    %14 = vsyncpa [#allocation8], 0
    // Predicated region
    $region2: #{bipedal_walker_forward.1} parent=1 // pred_check
      _
    $region3: #{bipedal_walker_forward.1} parent=1 // pred_check_branch
      %16 = sbr.rel (0) target = $region5
    $region4: #{bipedal_walker_forward.1} parent=1 // pred_region
      %18 = vsyncadd [#allocation3], 0
      %s20 = sshll.u32 %s0, 4
      %s21 = int_to_ptr.hbm [resolvable:$true] %s20
      %s22 = sshll.u32 [#allocation2], 4
      %s23 = int_to_ptr.vmem [resolvable:$true] %s22
      %25 = dma.hbm_to_vmem [thread:$0]  %s21, 128, %s23, [#allocation3]
    $region5: #{bipedal_walker_forward.1} parent=1 // pred_fallthru
      _
    // Predicated region
    $region6: #{bipedal_walker_forward.1} parent=1 // pred_check
      _
    $region7: #{bipedal_walker_forward.1} parent=1 // pred_check_branch
      %27 = sbr.rel (0) target = $region9
    $region8: #{bipedal_walker_forward.1} parent=1 // pred_region
      %29 = vsyncadd [#allocation5], 0
      %s30 = sshll.u32 %s1, 4
      %s31 = int_to_ptr.hbm [resolvable:$true] %s30
      %s32 = sshll.u32 [#allocation4], 4
      %s33 = int_to_ptr.vmem [resolvable:$true] %s32
      %38 = dma.hbm_to_vmem [thread:$0]  %s31, 384, %s33, [#allocation5], 128, 128, 8
    $region9: #{bipedal_walker_forward.1} parent=1 // pred_fallthru
      _
    // Predicated region
    $region10: #{bipedal_walker_forward.1} parent=1 // pred_check
      _
    $region11: #{bipedal_walker_forward.1} parent=1 // pred_check_branch
      %40 = sbr.rel (0) target = $region13
    $region12: #{bipedal_walker_forward.1} parent=1 // pred_region
      %42 = vsyncadd [#allocation5], 0
      %s44 = sshll.u32 %s2, 4
      %s45 = int_to_ptr.hbm [resolvable:$true] %s44
      %s46 = sshll.u32 [#allocation6], 4
      %s47 = int_to_ptr.vmem [resolvable:$true] %s46
      %49 = dma.hbm_to_vmem [thread:$0]  %s45, 32, %s47, [#allocation5]
    $region13: #{bipedal_walker_forward.1} parent=1 // pred_fallthru
      _
    // Predicated region
    $region14: #{bipedal_walker_forward.1} parent=1 // pred_check
      _
    $region15: #{bipedal_walker_forward.1} parent=1 // pred_check_branch
      %51 = sbr.rel (0) target = $region17
    $region16: #{bipedal_walker_forward.1} parent=1 // pred_region
      %53 = vsyncadd [#allocation8], 0
      %s54 = sshll.u32 %s3, 4
      %s55 = int_to_ptr.hbm [resolvable:$true] %s54
      %s56 = sshll.u32 [#allocation7], 4
      %s57 = int_to_ptr.vmem [resolvable:$true] %s56
      %62 = dma.hbm_to_vmem [thread:$0]  %s55, 4096, %s57, [#allocation8], 128, 128, 8
    $region17: #{bipedal_walker_forward.1} parent=1 // pred_fallthru
      _
    // Predicated region
    $region18: #{bipedal_walker_forward.1} parent=1 // pred_check
      _
    $region19: #{bipedal_walker_forward.1} parent=1 // pred_check_branch
      %64 = sbr.rel (0) target = $region21
    $region20: #{bipedal_walker_forward.1} parent=1 // pred_region
      _
    $region21: #{bipedal_walker_forward.1} parent=1 // pred_fallthru
      _
    // Predicated region
    $region22: #{bipedal_walker_forward.1} parent=1 // pred_check
      _
    $region23: #{bipedal_walker_forward.1} parent=1 // pred_check_branch
      %66 = sbr.rel (0) target = $region25
    $region24: #{bipedal_walker_forward.1} parent=1 // pred_region
      %68 = vsyncadd [#allocation8], 0
      %s69 = sshll.u32 %s5, 4
      %s70 = int_to_ptr.hbm [resolvable:$true] %s69
      %s71 = sshll.u32 [#allocation9], 4
      %s72 = int_to_ptr.vmem [resolvable:$true] %s71
      %77 = dma.hbm_to_vmem [thread:$0]  %s70, 2048, %s72, [#allocation8], 64, 64, 4
    $region25: #{bipedal_walker_forward.1} parent=1 // pred_fallthru
      _
    // Predicated region
    $region26: #{bipedal_walker_forward.1} parent=1 // pred_check
      _
    $region27: #{bipedal_walker_forward.1} parent=1 // pred_check_branch
      %79 = sbr.rel (0) target = $region29
    $region28: #{bipedal_walker_forward.1} parent=1 // pred_region
      _
    $region29: #{bipedal_walker_forward.1} parent=1 // pred_fallthru
      _
    // Predicated region
    $region30: #{bipedal_walker_forward.1} parent=1 // pred_check
      _
    $region31: #{bipedal_walker_forward.1} parent=1 // pred_check_branch
      %81 = sbr.rel (0) target = $region33
    $region32: #{bipedal_walker_forward.1} parent=1 // pred_region
      %83 = dma.done [#allocation3], 128
    $region33: #{bipedal_walker_forward.1} parent=1 // pred_fallthru
      _
    // Predicated region
    $region34: #{bipedal_walker_forward.1} parent=1 // pred_check
      _
    $region35: #{bipedal_walker_forward.1} parent=1 // pred_check_branch
      %85 = sbr.rel (0) target = $region37
    $region36: #{bipedal_walker_forward.1} parent=1 // pred_region
      %87 = dma.done [#allocation5], 384
    $region37: #{bipedal_walker_forward.1} parent=1 // pred_fallthru
      _
    // Predicated region
    $region38: #{bipedal_walker_forward.1} parent=1 // pred_check
      _
    $region39: #{bipedal_walker_forward.1} parent=1 // pred_check_branch
      %89 = sbr.rel (0) target = $region41
    $region40: #{bipedal_walker_forward.1} parent=1 // pred_region
      %91 = dma.done [#allocation5], 32
    $region41: #{bipedal_walker_forward.1} parent=1 // pred_fallthru
      _
    // Predicated region
    $region42: #{bipedal_walker_forward.1} parent=1 // pred_check
      _
    $region43: #{bipedal_walker_forward.1} parent=1 // pred_check_branch
      %93 = sbr.rel (0) target = $region45
    $region44: #{bipedal_walker_forward.1} parent=1 // pred_region
      %95 = dma.done [#allocation8], 4096
    $region45: #{bipedal_walker_forward.1} parent=1 // pred_fallthru
      _
    // Predicated region
    $region46: #{bipedal_walker_forward.1} parent=1 // pred_check
      _
    $region47: #{bipedal_walker_forward.1} parent=1 // pred_check_branch
      %97 = sbr.rel (0) target = $region49
    $region48: #{bipedal_walker_forward.1} parent=1 // pred_region
      %99 = dma.done [#allocation8], 2048
    $region49: #{bipedal_walker_forward.1} parent=1 // pred_fallthru
      _
    %v101 = vld [vmem:[#allocation2] sm:$0xff]
    %v102 = vpack.c.bf16 %v101, %v101
    %v103 = vld [vmem:[#allocation4] sm:$0xff]
    %v104 = vld [vmem:[#allocation4 + $0x8] sm:$0xff]
    %v105 = vld [vmem:[#allocation4 + $0x10] sm:$0xff]
    %v106 = vld [vmem:[#allocation6] sm:$0x3]
    %v108 = vperm.slane %v106, 0
    %v109 = vperm.slane %v106, 1
    %v115 = vunpack.c.l.b16 %v103
    %v116 = vunpack.c.h.b16 %v103
    %v117 = vunpack.c.l.b16 %v104
    %v118 = vunpack.c.h.b16 %v104
    %v119 = vunpack.c.l.b16 %v105
    %v120 = vunpack.c.h.b16 %v105
    %v121 = vpack.c.b16 %v117, %v115
    %v122 = vpack.c.b16 %v118, %v116
    %v123 = vpack.c.b16 %v119, %v119
    %v124 = vpack.c.b16 %v120, %v120
    %vm127 = vcmask 195584
    %v129 = vsel %vm127, %v102, 0
    %vm131 = vcmask 1043456
    %v133 = vsel %vm131, %v123, 0
    %v136 = vsel %vm131, %v124, 0
    %138 = vmatpush.bf16.msra.mxu0 0
    %139 = vmatpush.bf16.msra.mxu0 0
    %140 = vmatpush.bf16.msra.mxu0 0
    %141 = vmatpush.bf16.msra.mxu0 0
    %142 = vmatpush.bf16.msra.mxu0 0
    %143 = vmatpush.bf16.msra.mxu0 0
    %144 = vmatpush.bf16.msra.mxu0 %v133
    %145 = vmatpush.bf16.msra.mxu0 %v121
    %146 = vmatmul.bf16.gmra.mxu0 %v129
    %v147 = vpop.f32.mrf.mxu0
    %v148 = vadd.f32 %v108, %v147
    %v149 = vpop.f32.mrf.mxu0
    %150 = vdwg.mxu0
    %151 = vmatpush.bf16.msra.mxu0 0
    %152 = vmatpush.bf16.msra.mxu0 0
    %153 = vmatpush.bf16.msra.mxu0 0
    %154 = vmatpush.bf16.msra.mxu0 0
    %155 = vmatpush.bf16.msra.mxu0 0
    %156 = vmatpush.bf16.msra.mxu0 0
    %157 = vmatpush.bf16.msra.mxu0 %v136
    %158 = vmatpush.bf16.msra.mxu0 %v122
    %159 = vmatmul.bf16.gmra.mxu0 %v129
    %v160 = vpop.f32.mrf.mxu0
    %v161 = vadd.f32 %v109, %v160
    %v162 = vpop.f32.mrf.mxu0
    %163 = vdwg.mxu0
    %v164 = vtanh.pop %v148
    %v165 = vtanh.pop %v161
    %v166 = vpack.c.bf16 %v164, %v164
    %v167 = vpack.c.bf16 %v165, %v165
    %v168 = vld [vmem:[#allocation7] sm:$0xff]
    %v169 = vld [vmem:[#allocation7 + $0x8] sm:$0xff]
    %v170 = vld [vmem:[#allocation7 + $0x10] sm:$0xff]
    %v171 = vld [vmem:[#allocation7 + $0x18] sm:$0xff]
    %v172 = vld [vmem:[#allocation7 + $0x20] sm:$0xff]
    %v173 = vld [vmem:[#allocation7 + $0x28] sm:$0xff]
    %v174 = vld [vmem:[#allocation7 + $0x30] sm:$0xff]
    %v175 = vld [vmem:[#allocation7 + $0x38] sm:$0xff]
    %v176 = vld [vmem:[#allocation7 + $0x40] sm:$0xff]
    %v177 = vld [vmem:[#allocation7 + $0x48] sm:$0xff]
    %v178 = vld [vmem:[#allocation7 + $0x50] sm:$0xff]
    %v179 = vld [vmem:[#allocation7 + $0x58] sm:$0xff]
    %v180 = vld [vmem:[#allocation7 + $0x60] sm:$0xff]
    %v181 = vld [vmem:[#allocation7 + $0x68] sm:$0xff]
    %v182 = vld [vmem:[#allocation7 + $0x70] sm:$0xff]
    %v183 = vld [vmem:[#allocation7 + $0x78] sm:$0xff]
    %v184 = vld [vmem:[#allocation7 + $0x80] sm:$0xff]
    %v185 = vld [vmem:[#allocation7 + $0x88] sm:$0xff]
    %v186 = vld [vmem:[#allocation7 + $0x90] sm:$0xff]
    %v187 = vld [vmem:[#allocation7 + $0x98] sm:$0xff]
    %v188 = vld [vmem:[#allocation7 + $0xa0] sm:$0xff]
    %v189 = vld [vmem:[#allocation7 + $0xa8] sm:$0xff]
    %v190 = vld [vmem:[#allocation7 + $0xb0] sm:$0xff]
    %v191 = vld [vmem:[#allocation7 + $0xb8] sm:$0xff]
    %v192 = vld [vmem:[#allocation7 + $0xc0] sm:$0xff]
    %v193 = vld [vmem:[#allocation7 + $0xc8] sm:$0xff]
    %v194 = vld [vmem:[#allocation7 + $0xd0] sm:$0xff]
    %v195 = vld [vmem:[#allocation7 + $0xd8] sm:$0xff]
    %v196 = vld [vmem:[#allocation7 + $0xe0] sm:$0xff]
    %v197 = vld [vmem:[#allocation7 + $0xe8] sm:$0xff]
    %v198 = vld [vmem:[#allocation7 + $0xf0] sm:$0xff]
    %v199 = vld [vmem:[#allocation7 + $0xf8] sm:$0xff]
    %v200 = vld [vmem:[%s4] sm:$0x3]
    %v202 = vperm.slane %v200, 0
    %v203 = vperm.slane %v200, 1
    %v238 = vunpack.c.l.b16 %v168
    %v239 = vunpack.c.h.b16 %v168
    %v240 = vunpack.c.l.b16 %v169
    %v241 = vunpack.c.h.b16 %v169
    %v242 = vunpack.c.l.b16 %v170
    %v243 = vunpack.c.h.b16 %v170
    %v244 = vunpack.c.l.b16 %v171
    %v245 = vunpack.c.h.b16 %v171
    %v246 = vunpack.c.l.b16 %v172
    %v247 = vunpack.c.h.b16 %v172
    %v248 = vunpack.c.l.b16 %v173
    %v249 = vunpack.c.h.b16 %v173
    %v250 = vunpack.c.l.b16 %v174
    %v251 = vunpack.c.h.b16 %v174
    %v252 = vunpack.c.l.b16 %v175
    %v253 = vunpack.c.h.b16 %v175
    %v254 = vunpack.c.l.b16 %v176
    %v255 = vunpack.c.h.b16 %v176
    %v256 = vunpack.c.l.b16 %v177
    %v257 = vunpack.c.h.b16 %v177
    %v258 = vunpack.c.l.b16 %v178
    %v259 = vunpack.c.h.b16 %v178
    %v260 = vunpack.c.l.b16 %v179
    %v261 = vunpack.c.h.b16 %v179
    %v262 = vunpack.c.l.b16 %v180
    %v263 = vunpack.c.h.b16 %v180
    %v264 = vunpack.c.l.b16 %v181
    %v265 = vunpack.c.h.b16 %v181
    %v266 = vunpack.c.l.b16 %v182
    %v267 = vunpack.c.h.b16 %v182
    %v268 = vunpack.c.l.b16 %v183
    %v269 = vunpack.c.h.b16 %v183
    %v270 = vunpack.c.l.b16 %v184
    %v271 = vunpack.c.h.b16 %v184
    %v272 = vunpack.c.l.b16 %v185
    %v273 = vunpack.c.h.b16 %v185
    %v274 = vunpack.c.l.b16 %v186
    %v275 = vunpack.c.h.b16 %v186
    %v276 = vunpack.c.l.b16 %v187
    %v277 = vunpack.c.h.b16 %v187
    %v278 = vunpack.c.l.b16 %v188
    %v279 = vunpack.c.h.b16 %v188
    %v280 = vunpack.c.l.b16 %v189
    %v281 = vunpack.c.h.b16 %v189
    %v282 = vunpack.c.l.b16 %v190
    %v283 = vunpack.c.h.b16 %v190
    %v284 = vunpack.c.l.b16 %v191
    %v285 = vunpack.c.h.b16 %v191
    %v286 = vunpack.c.l.b16 %v192
    %v287 = vunpack.c.h.b16 %v192
    %v288 = vunpack.c.l.b16 %v193
    %v289 = vunpack.c.h.b16 %v193
    %v290 = vunpack.c.l.b16 %v194
    %v291 = vunpack.c.h.b16 %v194
    %v292 = vunpack.c.l.b16 %v195
    %v293 = vunpack.c.h.b16 %v195
    %v294 = vunpack.c.l.b16 %v196
    %v295 = vunpack.c.h.b16 %v196
    %v296 = vunpack.c.l.b16 %v197
    %v297 = vunpack.c.h.b16 %v197
    %v298 = vunpack.c.l.b16 %v198
    %v299 = vunpack.c.h.b16 %v198
    %v300 = vunpack.c.l.b16 %v199
    %v301 = vunpack.c.h.b16 %v199
    %v302 = vpack.c.b16 %v240, %v238
    %v303 = vpack.c.b16 %v241, %v239
    %v304 = vpack.c.b16 %v244, %v242
    %v305 = vpack.c.b16 %v245, %v243
    %v306 = vpack.c.b16 %v248, %v246
    %v307 = vpack.c.b16 %v249, %v247
    %v308 = vpack.c.b16 %v252, %v250
    %v309 = vpack.c.b16 %v253, %v251
    %v310 = vpack.c.b16 %v256, %v254
    %v311 = vpack.c.b16 %v257, %v255
    %v312 = vpack.c.b16 %v260, %v258
    %v313 = vpack.c.b16 %v261, %v259
    %v314 = vpack.c.b16 %v264, %v262
    %v315 = vpack.c.b16 %v265, %v263
    %v316 = vpack.c.b16 %v268, %v266
    %v317 = vpack.c.b16 %v269, %v267
    %v318 = vpack.c.b16 %v272, %v270
    %v319 = vpack.c.b16 %v273, %v271
    %v320 = vpack.c.b16 %v276, %v274
    %v321 = vpack.c.b16 %v277, %v275
    %v322 = vpack.c.b16 %v280, %v278
    %v323 = vpack.c.b16 %v281, %v279
    %v324 = vpack.c.b16 %v284, %v282
    %v325 = vpack.c.b16 %v285, %v283
    %v326 = vpack.c.b16 %v288, %v286
    %v327 = vpack.c.b16 %v289, %v287
    %v328 = vpack.c.b16 %v292, %v290
    %v329 = vpack.c.b16 %v293, %v291
    %v330 = vpack.c.b16 %v296, %v294
    %v331 = vpack.c.b16 %v297, %v295
    %v332 = vpack.c.b16 %v300, %v298
    %v333 = vpack.c.b16 %v301, %v299
    %366 = vmatpush.bf16.msra.mxu0 %v316
    %367 = vmatpush.bf16.msra.mxu0 %v314
    %368 = vmatpush.bf16.msra.mxu0 %v312
    %369 = vmatpush.bf16.msra.mxu0 %v310
    %370 = vmatpush.bf16.msra.mxu0 %v308
    %371 = vmatpush.bf16.msra.mxu0 %v306
    %372 = vmatpush.bf16.msra.mxu0 %v304
    %373 = vmatpush.bf16.msra.mxu0 %v302
    %374 = vmatmul.bf16.gmra.mxu0 %v166
    %v375 = vpop.f32.mrf.mxu0
    %v376 = vadd.f32 %v202, %v375
    %v377 = vpop.f32.mrf.mxu0
    %378 = vdwg.mxu0
    %379 = vmatpush.bf16.msra.mxu0 %v332
    %380 = vmatpush.bf16.msra.mxu0 %v330
    %381 = vmatpush.bf16.msra.mxu0 %v328
    %382 = vmatpush.bf16.msra.mxu0 %v326
    %383 = vmatpush.bf16.msra.mxu0 %v324
    %384 = vmatpush.bf16.msra.mxu0 %v322
    %385 = vmatpush.bf16.msra.mxu0 %v320
    %386 = vmatpush.bf16.msra.mxu0 %v318
    %387 = vmatmul.bf16.gmra.mxu0 %v167
    %v388 = vpop.f32.mrf.mxu0
    %v389 = vadd.f32 %v376, %v388
    %v390 = vpop.f32.mrf.mxu0
    %391 = vdwg.mxu0
    %392 = vmatpush.bf16.msra.mxu0 %v317
    %393 = vmatpush.bf16.msra.mxu0 %v315
    %394 = vmatpush.bf16.msra.mxu0 %v313
    %395 = vmatpush.bf16.msra.mxu0 %v311
    %396 = vmatpush.bf16.msra.mxu0 %v309
    %397 = vmatpush.bf16.msra.mxu0 %v307
    %398 = vmatpush.bf16.msra.mxu0 %v305
    %399 = vmatpush.bf16.msra.mxu0 %v303
    %400 = vmatmul.bf16.gmra.mxu0 %v166
    %v401 = vpop.f32.mrf.mxu0
    %v402 = vadd.f32 %v203, %v401
    %v403 = vpop.f32.mrf.mxu0
    %404 = vdwg.mxu0
    %405 = vmatpush.bf16.msra.mxu0 %v333
    %406 = vmatpush.bf16.msra.mxu0 %v331
    %407 = vmatpush.bf16.msra.mxu0 %v329
    %408 = vmatpush.bf16.msra.mxu0 %v327
    %409 = vmatpush.bf16.msra.mxu0 %v325
    %410 = vmatpush.bf16.msra.mxu0 %v323
    %411 = vmatpush.bf16.msra.mxu0 %v321
    %412 = vmatpush.bf16.msra.mxu0 %v319
    %413 = vmatmul.bf16.gmra.mxu0 %v167
    %v414 = vpop.f32.mrf.mxu0
    %v415 = vadd.f32 %v402, %v414
    %v416 = vpop.f32.mrf.mxu0
    %417 = vdwg.mxu0
    %v418 = vtanh.pop %v389
    %v419 = vtanh.pop %v415
    %v420 = vpack.c.bf16 %v418, %v418
    %v421 = vpack.c.bf16 %v419, %v419
    %v422 = vld [vmem:[#allocation9] sm:$0xf]
    %v423 = vld [vmem:[#allocation9 + $0x4] sm:$0xf]
    %v424 = vld [vmem:[#allocation9 + $0x8] sm:$0xf]
    %v425 = vld [vmem:[#allocation9 + $0xc] sm:$0xf]
    %v426 = vld [vmem:[#allocation9 + $0x10] sm:$0xf]
    %v427 = vld [vmem:[#allocation9 + $0x14] sm:$0xf]
    %v428 = vld [vmem:[#allocation9 + $0x18] sm:$0xf]
    %v429 = vld [vmem:[#allocation9 + $0x1c] sm:$0xf]
    %v430 = vld [vmem:[#allocation9 + $0x20] sm:$0xf]
    %v431 = vld [vmem:[#allocation9 + $0x24] sm:$0xf]
    %v432 = vld [vmem:[#allocation9 + $0x28] sm:$0xf]
    %v433 = vld [vmem:[#allocation9 + $0x2c] sm:$0xf]
    %v434 = vld [vmem:[#allocation9 + $0x30] sm:$0xf]
    %v435 = vld [vmem:[#allocation9 + $0x34] sm:$0xf]
    %v436 = vld [vmem:[#allocation9 + $0x38] sm:$0xf]
    %v437 = vld [vmem:[#allocation9 + $0x3c] sm:$0xf]
    %v438 = vld [vmem:[#allocation9 + $0x40] sm:$0xf]
    %v439 = vld [vmem:[#allocation9 + $0x44] sm:$0xf]
    %v440 = vld [vmem:[#allocation9 + $0x48] sm:$0xf]
    %v441 = vld [vmem:[#allocation9 + $0x4c] sm:$0xf]
    %v442 = vld [vmem:[#allocation9 + $0x50] sm:$0xf]
    %v443 = vld [vmem:[#allocation9 + $0x54] sm:$0xf]
    %v444 = vld [vmem:[#allocation9 + $0x58] sm:$0xf]
    %v445 = vld [vmem:[#allocation9 + $0x5c] sm:$0xf]
    %v446 = vld [vmem:[#allocation9 + $0x60] sm:$0xf]
    %v447 = vld [vmem:[#allocation9 + $0x64] sm:$0xf]
    %v448 = vld [vmem:[#allocation9 + $0x68] sm:$0xf]
    %v449 = vld [vmem:[#allocation9 + $0x6c] sm:$0xf]
    %v450 = vld [vmem:[#allocation9 + $0x70] sm:$0xf]
    %v451 = vld [vmem:[#allocation9 + $0x74] sm:$0xf]
    %v452 = vld [vmem:[#allocation9 + $0x78] sm:$0xf]
    %v453 = vld [vmem:[#allocation9 + $0x7c] sm:$0xf]
    %v454 = vld [vmem:[%s6] sm:$0x1]
    %v456 = vperm.slane %v454, 0
    %v490 = vunpack.c.l.b16 %v422
    %v491 = vunpack.c.l.b16 %v423
    %v492 = vunpack.c.l.b16 %v424
    %v493 = vunpack.c.l.b16 %v425
    %v494 = vunpack.c.l.b16 %v426
    %v495 = vunpack.c.l.b16 %v427
    %v496 = vunpack.c.l.b16 %v428
    %v497 = vunpack.c.l.b16 %v429
    %v498 = vunpack.c.l.b16 %v430
    %v499 = vunpack.c.l.b16 %v431
    %v500 = vunpack.c.l.b16 %v432
    %v501 = vunpack.c.l.b16 %v433
    %v502 = vunpack.c.l.b16 %v434
    %v503 = vunpack.c.l.b16 %v435
    %v504 = vunpack.c.l.b16 %v436
    %v505 = vunpack.c.l.b16 %v437
    %v506 = vunpack.c.l.b16 %v438
    %v507 = vunpack.c.l.b16 %v439
    %v508 = vunpack.c.l.b16 %v440
    %v509 = vunpack.c.l.b16 %v441
    %v510 = vunpack.c.l.b16 %v442
    %v511 = vunpack.c.l.b16 %v443
    %v512 = vunpack.c.l.b16 %v444
    %v513 = vunpack.c.l.b16 %v445
    %v514 = vunpack.c.l.b16 %v446
    %v515 = vunpack.c.l.b16 %v447
    %v516 = vunpack.c.l.b16 %v448
    %v517 = vunpack.c.l.b16 %v449
    %v518 = vunpack.c.l.b16 %v450
    %v519 = vunpack.c.l.b16 %v451
    %v520 = vunpack.c.l.b16 %v452
    %v521 = vunpack.c.l.b16 %v453
    %v522 = vpack.c.b16 %v491, %v490
    %v523 = vpack.c.b16 %v493, %v492
    %v524 = vpack.c.b16 %v495, %v494
    %v525 = vpack.c.b16 %v497, %v496
    %v526 = vpack.c.b16 %v499, %v498
    %v527 = vpack.c.b16 %v501, %v500
    %v528 = vpack.c.b16 %v503, %v502
    %v529 = vpack.c.b16 %v505, %v504
    %v530 = vpack.c.b16 %v507, %v506
    %v531 = vpack.c.b16 %v509, %v508
    %v532 = vpack.c.b16 %v511, %v510
    %v533 = vpack.c.b16 %v513, %v512
    %v534 = vpack.c.b16 %v515, %v514
    %v535 = vpack.c.b16 %v517, %v516
    %v536 = vpack.c.b16 %v519, %v518
    %v537 = vpack.c.b16 %v521, %v520
    %554 = vmatpush.bf16.msra.mxu0 %v529
    %555 = vmatpush.bf16.msra.mxu0 %v528
    %556 = vmatpush.bf16.msra.mxu0 %v527
    %557 = vmatpush.bf16.msra.mxu0 %v526
    %558 = vmatpush.bf16.msra.mxu0 %v525
    %559 = vmatpush.bf16.msra.mxu0 %v524
    %560 = vmatpush.bf16.msra.mxu0 %v523
    %561 = vmatpush.bf16.msra.mxu0 %v522
    %562 = vmatmul.bf16.gmra.mxu0 %v420
    %v563 = vpop.f32.mrf.mxu0
    %v564 = vadd.f32 %v456, %v563
    %v565 = vpop.f32.mrf.mxu0
    %566 = vdwg.mxu0
    %567 = vmatpush.bf16.msra.mxu0 %v537
    %568 = vmatpush.bf16.msra.mxu0 %v536
    %569 = vmatpush.bf16.msra.mxu0 %v535
    %570 = vmatpush.bf16.msra.mxu0 %v534
    %571 = vmatpush.bf16.msra.mxu0 %v533
    %572 = vmatpush.bf16.msra.mxu0 %v532
    %573 = vmatpush.bf16.msra.mxu0 %v531
    %574 = vmatpush.bf16.msra.mxu0 %v530
    %575 = vmatmul.bf16.gmra.mxu0 %v421
    %v576 = vpop.f32.mrf.mxu0
    %v577 = vadd.f32 %v564, %v576
    %v578 = vpop.f32.mrf.mxu0
    %579 = vdwg.mxu0
    %v580 = vtanh.pop %v577
    %v581 = vpack.c.bf16 %v580, %v580
    %582 = vst [vmem:[%s7] sm:$0xf] %v581
    // Predicated region
    $region50: #{bipedal_walker_forward.1} parent=1 // pred_check
      _
    $region51: #{bipedal_walker_forward.1} parent=1 // pred_check_branch
      %584 = sbr.rel (0) target = $region53
    $region52: #{bipedal_walker_forward.1} parent=1 // pred_region
      _
    $region53: #{bipedal_walker_forward.1} parent=1 // pred_fallthru
      _
    // Predicated region
    $region54: #{bipedal_walker_forward.1} parent=1 // pred_check
      _
    $region55: #{bipedal_walker_forward.1} parent=1 // pred_check_branch
      %586 = sbr.rel (0) target = $region57
    $region56: #{bipedal_walker_forward.1} parent=1 // pred_region
      _
    $region57: #{bipedal_walker_forward.1} parent=1 // pred_fallthru
      _
    %587 = vsyncpa [#allocation3], 1
    %588 = vsyncpa [#allocation5], 1
    %589 = vsyncpa [#allocation8], 1

</llo_original>
